<compile_context>
chip_gen: v6e
topology: v6e:2x2x1
jax: 0.10.0
libtpu: 0.0.40
codegen_flags: <defaults>
</compile_context>

<pallas_src>
import functools
import math

import jax
import jax.numpy as jnp
from jax.experimental import pallas as pl
from jax.experimental.pallas import tpu as pltpu


# ----------------------------------------------------------------------------
# helpers
# ----------------------------------------------------------------------------
def _round_up(x: int, m: int) -> int:
    return (x + m - 1) // m * m


def _pick_row_tile(n_rows: int, max_tile: int = 512) -> int:
    """Row tile: big enough to amortize per-step overhead, small enough for
    v7x VMEM, and >=2 grid steps when possible (v7x has 2 TensorCores)."""
    n8 = _round_up(max(n_rows, 8), 8)
    tm = min(max_tile, n8)
    if n8 // tm < 2 and n8 >= 16:
        tm = _round_up(max(n8 // 2, 8), 8)
    return tm


def _softplus(y):
    # PyTorch F.softplus (threshold=20), numerically stable log1p form.
    return jnp.where(y > 20.0, y,
                     jnp.log1p(jnp.exp(-jnp.abs(y))) + jnp.maximum(y, 0.0))


def fixed_embedding_table(c_in: int, d_model: int) -> jnp.ndarray:
    """Frozen sinusoidal table, identical to FixedEmbedding.__init__ (even d_model)."""
    position = jnp.arange(c_in, dtype=jnp.float32)[:, None]
    div_term = jnp.exp(
        jnp.arange(0, d_model, 2, dtype=jnp.float32) * -(math.log(10000.0) / d_model))
    w = jnp.zeros((c_in, d_model), jnp.float32)
    w = w.at[:, 0::2].set(jnp.sin(position * div_term))
    w = w.at[:, 1::2].set(jnp.cos(position * div_term))
    return w


def positional_table(max_len: int, d_model: int) -> jnp.ndarray:
    """PositionalEmbedding table: zero pad row + sinusoidal rows -> (max_len+1, d)."""
    j = jnp.arange(d_model)
    pos = jnp.arange(max_len, dtype=jnp.float32)[:, None]
    denom = jnp.power(10000.0, 2.0 * (j // 2).astype(jnp.float32) / d_model)[None, :]
    ang = pos / denom
    pe = jnp.where((j % 2 == 0)[None, :], jnp.sin(ang), jnp.cos(ang))
    return jnp.concatenate([jnp.zeros((1, d_model), jnp.float32), pe], axis=0)


# ----------------------------------------------------------------------------
# Kernel 1: fused DataEmbedding (token conv matmul + temporal + positional + sum)
# ----------------------------------------------------------------------------
def _embed_kernel(u_ref, tw_ref, idx_ref, tt_ref, pt_ref, o_ref):
    # u_ref  : (TM, 3*c_in)  unfolded circular-conv inputs
    # tw_ref : (3*c_in, d)   token conv weight
    # idx_ref: (TM, 8) int32 [month, day, weekday, hour, pos, -1, -1, -1]
    #          (temporal columns already offset into the fused table)
    # tt_ref : (Tt, d) fused temporal table;  pt_ref: (Tp, d) positional table
    tm = u_ref.shape[0]
    x1 = jnp.dot(u_ref[...], tw_ref[...], preferred_element_type=jnp.float32)

    idx = idx_ref[...]
    tt_rows = tt_ref.shape[0]
    col_t = jax.lax.broadcasted_iota(jnp.int32, (tm, tt_rows), 1)
    mh = jnp.zeros((tm, tt_rows), jnp.float32)
    for c in range(4):                                    # month/day/weekday/hour
        mh = mh + (idx[:, c:c + 1] == col_t).astype(jnp.float32)
    x2 = jnp.dot(mh, tt_ref[...], preferred_element_type=jnp.float32)

    pt_rows = pt_ref.shape[0]
    col_p = jax.lax.broadcasted_iota(jnp.int32, (tm, pt_rows), 1)
    oh = (idx[:, 4:5] == col_p).astype(jnp.float32)
    x3 = jnp.dot(oh, pt_ref[...], preferred_element_type=jnp.float32)

    o_ref[...] = x1 + x2 + x3                             # single full-tile store


def data_embedding_pallas(params, x_dec, visit_len, x_mark_dec):
    bsz, l, c_in = x_dec.shape
    d_model = params["token_w"].shape[1]
    n = bsz * l

    # circular Conv1d(k=3, bias=False) expressed as unfold + matmul
    xpad = jnp.concatenate([x_dec[:, -1:, :], x_dec, x_dec[:, :1, :]], axis=1)
    u = jnp.concatenate([xpad[:, k:k + l, :] for k in range(3)], axis=-1)
    u = u.reshape(n, 3 * c_in).astype(jnp.float32)

    idx_t = x_mark_dec.reshape(n, 4).astype(jnp.int32) + params["temporal_offsets"][None, :]
    pos_ids = jnp.where(jnp.arange(l)[None, :] < visit_len[:, None],
                        jnp.arange(1, l + 1, dtype=jnp.int32)[None, :],
                        0).reshape(n, 1)
    idx = jnp.concatenate([idx_t, pos_ids, jnp.full((n, 3), -1, jnp.int32)], axis=1)

    tt = params["temporal_table"].astype(jnp.float32)
    pt = params["pos_table"].astype(jnp.float32)
    tt = jnp.pad(tt, ((0, _round_up(tt.shape[0], 8) - tt.shape[0]), (0, 0)))
    pt = jnp.pad(pt, ((0, _round_up(pt.shape[0], 8) - pt.shape[0]), (0, 0)))

    tm = _pick_row_tile(n)
    n_pad = _round_up(n, tm)
    if n_pad > n:
        u = jnp.pad(u, ((0, n_pad - n), (0, 0)))
        idx = jnp.pad(idx, ((0, n_pad - n), (0, 0)), constant_values=-1)

    out = pl.pallas_call(
        _embed_kernel,
        out_shape=jax.ShapeDtypeStruct((n_pad, d_model), jnp.float32),
        grid_spec=pltpu.PrefetchScalarGridSpec(
            num_scalar_prefetch=0,
            grid=(n_pad // tm,),
            in_specs=[
                pl.BlockSpec((tm, 3 * c_in), lambda i: (i, 0)),
                pl.BlockSpec((3 * c_in, d_model), lambda i: (0, 0)),
                pl.BlockSpec((tm, 8), lambda i: (i, 0)),
                pl.BlockSpec(tt.shape, lambda i: (0, 0)),
                pl.BlockSpec(pt.shape, lambda i: (0, 0)),
            ],
            out_specs=pl.BlockSpec((tm, d_model), lambda i: (i, 0)),
        ),
        compiler_params=pltpu.CompilerParams(dimension_semantics=("parallel",)),
    )(u, params["token_w"].astype(jnp.float32), idx, tt, pt)

    return out[:n].reshape(bsz, l, d_model)


# ----------------------------------------------------------------------------
# Kernel 2: row-tiled matmul (+bias, + optional column-partial softplus)
# ----------------------------------------------------------------------------
def _linear_kernel(x_ref, w_ref, b_ref, o_ref, *, softplus_cols, mxu_dtype):
    x = x_ref[...]
    w = w_ref[...]
    if mxu_dtype != jnp.float32:          # bf16 MXU operands, f32 accumulate
        x = x.astype(mxu_dtype)
        w = w.astype(mxu_dtype)
    y = jnp.dot(x, w, preferred_element_type=jnp.float32) + b_ref[...]
    if softplus_cols:
        col = jax.lax.broadcasted_iota(jnp.int32, y.shape, 1)
        y = jnp.where(col < softplus_cols, _softplus(y), y)
    o_ref[...] = y


def fused_linear(x, w, b=None, *, softplus_cols=0, mxu_dtype=jnp.float32):
    n, kdim = x.shape
    m = w.shape[1]
    bias = (jnp.zeros((1, m), jnp.float32) if b is None
            else b.reshape(1, m).astype(jnp.float32))
    tm = _pick_row_tile(n)
    n_pad = _round_up(n, tm)
    xp = x.astype(jnp.float32)
    if n_pad > n:
        xp = jnp.pad(xp, ((0, n_pad - n), (0, 0)))

    out = pl.pallas_call(
        functools.partial(_linear_kernel, softplus_cols=softplus_cols,
                          mxu_dtype=mxu_dtype),
        out_shape=jax.ShapeDtypeStruct((n_pad, m), jnp.float32),
        grid_spec=pltpu.PrefetchScalarGridSpec(
            num_scalar_prefetch=0,
            grid=(n_pad // tm,),
            in_specs=[
                pl.BlockSpec((tm, kdim), lambda i: (i, 0)),
                pl.BlockSpec((kdim, m), lambda i: (0, 0)),
                pl.BlockSpec((1, m), lambda i: (0, 0)),
            ],
            out_specs=pl.BlockSpec((tm, m), lambda i: (i, 0)),
        ),
        compiler_params=pltpu.CompilerParams(dimension_semantics=("parallel",)),
    )(xp, w.astype(jnp.float32), bias)
    return out[:n] if n_pad > n else out


# ----------------------------------------------------------------------------
# Kernel 3: matmul + bias + residual add + LayerNorm (fused epilogue)
# ----------------------------------------------------------------------------
def _mm_addln_kernel(x_ref, w_ref, b_ref, r_ref, g_ref, bb_ref, o_ref, *, mxu_dtype):
    x = x_ref[...]
    w = w_ref[...]
    if mxu_dtype != jnp.float32:
        x = x.astype(mxu_dtype)
        w = w.astype(mxu_dtype)
    y = jnp.dot(x, w, preferred_element_type=jnp.float32) + b_ref[...]
    s = r_ref[...] + y
    mu = jnp.mean(s, axis=-1, keepdims=True)
    var = jnp.mean(jnp.square(s - mu), axis=-1, keepdims=True)
    o_ref[...] = (s - mu) * jax.lax.rsqrt(var + 1e-5) * g_ref[...] + bb_ref[...]


def mm_residual_layernorm(x, w, b, resid, gamma, beta, *, mxu_dtype=jnp.float32):
    n, kdim = x.shape
    m = w.shape[1]
    bias = (jnp.zeros((1, m), jnp.float32) if b is None
            else b.reshape(1, m).astype(jnp.float32))
    tm = _pick_row_tile(n)
    n_pad = _round_up(n, tm)
    xp = x.astype(jnp.float32)
    rp = resid.astype(jnp.float32)
    if n_pad > n:
        xp = jnp.pad(xp, ((0, n_pad - n), (0, 0)))
        rp = jnp.pad(rp, ((0, n_pad - n), (0, 0)))

    out = pl.pallas_call(
        functools.partial(_mm_addln_kernel, mxu_dtype=mxu_dtype),
        out_shape=jax.ShapeDtypeStruct((n_pad, m), jnp.float32),
        grid_spec=pltpu.PrefetchScalarGridSpec(
            num_scalar_prefetch=0,
            grid=(n_pad // tm,),
            in_specs=[
                pl.BlockSpec((tm, kdim), lambda i: (i, 0)),
                pl.BlockSpec((kdim, m), lambda i: (0, 0)),
                pl.BlockSpec((1, m), lambda i: (0, 0)),
                pl.BlockSpec((tm, m), lambda i: (i, 0)),
                pl.BlockSpec((1, m), lambda i: (0, 0)),
                pl.BlockSpec((1, m), lambda i: (0, 0)),
            ],
            out_specs=pl.BlockSpec((tm, m), lambda i: (i, 0)),
        ),
        compiler_params=pltpu.CompilerParams(dimension_semantics=("parallel",)),
    )(xp, w.astype(jnp.float32), bias, rp,
      gamma.reshape(1, m).astype(jnp.float32),
      beta.reshape(1, m).astype(jnp.float32))
    return out[:n] if n_pad > n else out


# ----------------------------------------------------------------------------
# Kernel 4: Mamba causal depthwise Conv1d + SiLU (whole batch, one launch)
# ----------------------------------------------------------------------------
def _dwconv_silu_kernel(xp_ref, w_ref, b_ref, o_ref):
    # xp_ref: (B, L+K-1, d) left-zero-padded; w_ref: (K, d); b_ref: (1, d)
    l = o_ref.shape[1]
    kk = w_ref.shape[0]
    acc = jnp.zeros(o_ref.shape, jnp.float32) + b_ref[...]
    for k in range(kk):                          # K (=4) static taps, unrolled
        acc = acc + xp_ref[:, k:k + l, :] * w_ref[k][None, None, :]
    o_ref[...] = acc * jax.nn.sigmoid(acc)       # SiLU, single full-tile store


def causal_dwconv_silu(x, wk, bias):
    bsz, l, d = x.shape
    k = wk.shape[0]
    xp = jnp.pad(x.astype(jnp.float32), ((0, 0), (k - 1, 0), (0, 0)))
    return pl.pallas_call(
        _dwconv_silu_kernel,
        out_shape=jax.ShapeDtypeStruct((bsz, l, d), jnp.float32),
    )(xp, wk.astype(jnp.float32), bias.reshape(1, d).astype(jnp.float32))


# ----------------------------------------------------------------------------
# Kernel 5: selective scan + D skip + SiLU(res) gating (hoisted exp, one store)
# ----------------------------------------------------------------------------
def _scan_kernel(u_ref, dt_ref, a_ref, b_ref, c_ref, d_ref, res_ref, o_ref):
    # u/dt/res/o: (B, L, d_in); a_ref: (n, d_in) = A^T; b/c: (B, L, n); d_ref: (1, d_in)
    bsz, l, d_in = u_ref.shape
    n = a_ref.shape[0]
    u = u_ref[...]
    dt = dt_ref[...]
    a_t = a_ref[...]
    bm = b_ref[...]
    cm = c_ref[...]

    # Hoisted discretization: one big EUP exp instead of L tiny ones.
    da = jnp.exp(dt[:, :, None, :] * a_t[None, None, :, :])        # (B, L, n, d_in)
    dbu = (dt * u)[:, :, None, :] * bm[:, :, :, None]               # (B, L, n, d_in)

    x = jnp.zeros((bsz, n, d_in), jnp.float32)                      # SSM state
    ys = []
    for t in range(l):                     # static unroll (L small at demo size)
        x = da[:, t] * x + dbu[:, t]
        ys.append(jnp.sum(x * cm[:, t, :, None], axis=1))           # (B, d_in)
    y = jnp.stack(ys, axis=1) + u * d_ref[...]                      # D skip
    res = res_ref[...]
    o_ref[...] = y * (res * jax.nn.sigmoid(res))                    # ONE full store


def selective_scan_gate(u, delta, A, Bm, Cm, D, res):
    bsz, l, d_in = u.shape
    return pl.pallas_call(
        _scan_kernel,
        out_shape=jax.ShapeDtypeStruct((bsz, l, d_in), jnp.float32),
    )(u.astype(jnp.float32), delta.astype(jnp.float32),
      A.T.astype(jnp.float32),                        # (n, d_in)
      Bm.astype(jnp.float32), Cm.astype(jnp.float32), # native (B, L, n) layout
      D.reshape(1, d_in).astype(jnp.float32), res.astype(jnp.float32))


# ----------------------------------------------------------------------------
# Kernel 6: causal full attention -- grid over batch, ALL heads per step,
#            fed directly from the fused [q|k|v] projection (no transposes)
# ----------------------------------------------------------------------------
def _attn_kernel(qkv_ref, o_ref, *, n_heads, scale, mxu_dtype):
    # qkv_ref: (1, L, 3*d_model); o_ref: (1, L, d_model)
    l = qkv_ref.shape[1]
    dm = o_ref.shape[2]
    e = dm // n_heads
    qkv = qkv_ref[0]                                     # (L, 3*dm)
    row = jax.lax.broadcasted_iota(jnp.int32, (l, l), 0)
    col = jax.lax.broadcasted_iota(jnp.int32, (l, l), 1)
    causal = col > row
    outs = []
    for h in range(n_heads):                             # heads unrolled in-step
        qh = qkv[:, h * e:(h + 1) * e]
        kh = qkv[:, dm + h * e:dm + (h + 1) * e]
        vh = qkv[:, 2 * dm + h * e:2 * dm + (h + 1) * e]
        if mxu_dtype != jnp.float32:
            qh = qh.astype(mxu_dtype)
            kh = kh.astype(mxu_dtype)
            vh = vh.astype(mxu_dtype)
        s = jax.lax.dot_general(qh, kh, (((1,), (1,)), ((), ())),
                                preferred_element_type=jnp.float32)   # (L, L)
        s = jnp.where(causal, -1e30, s) * scale
        m = jnp.max(s, axis=-1, keepdims=True)
        p = jnp.exp(s - m)                               # softmax kept in f32
        p = p / jnp.sum(p, axis=-1, keepdims=True)
        if mxu_dtype != jnp.float32:
            p = p.astype(mxu_dtype)
        outs.append(jnp.dot(p, vh, preferred_element_type=jnp.float32))
    o_ref[0] = jnp.concatenate(outs, axis=1)             # (L, d_model) one store


def causal_attention_fused(qkv, n_heads, *, mxu_dtype=jnp.float32):
    bsz, l, three_dm = qkv.shape
    dm = three_dm // 3
    e = dm // n_heads
    return pl.pallas_call(
        functools.partial(_attn_kernel, n_heads=n_heads,
                          scale=1.0 / math.sqrt(e), mxu_dtype=mxu_dtype),
        out_shape=jax.ShapeDtypeStruct((bsz, l, dm), jnp.float32),
        grid_spec=pltpu.PrefetchScalarGridSpec(
            num_scalar_prefetch=0,
            grid=(bsz,),
            in_specs=[pl.BlockSpec((1, l, three_dm), lambda b: (b, 0, 0))],
            out_specs=pl.BlockSpec((1, l, dm), lambda b: (b, 0, 0)),
        ),
        compiler_params=pltpu.CompilerParams(dimension_semantics=("parallel",)),
    )(qkv.astype(jnp.float32))


# ----------------------------------------------------------------------------
# MAModel forward -- Pallas path
# ----------------------------------------------------------------------------
def ma_model_forward(params, x_dec, visit_len, x_mark_dec, *, cfg,
                     mxu_dtype=jnp.float32):
    d_model, d_inner = cfg["d_model"], cfg["d_inner"]
    d_state, dt_rank, n_heads = cfg["d_state"], cfg["dt_rank"], cfg["n_heads"]
    bsz, l, _ = x_dec.shape
    n = bsz * l

    # fused DataEmbedding (dropout: eval mode -> identity)
    x = data_embedding_pallas(params, x_dec, visit_len, x_mark_dec)

    for lyr in params["layers"]:
        xr = x.reshape(n, d_model)

        # ---- MambaBlock -----------------------------------------------------
        x_and_res = fused_linear(xr, lyr["in_proj_w"], mxu_dtype=mxu_dtype)
        xi = x_and_res[:, :d_inner].reshape(bsz, l, d_inner)
        res = x_and_res[:, d_inner:].reshape(bsz, l, d_inner)

        xc = causal_dwconv_silu(xi, lyr["conv_w"], lyr["conv_b"])

        # x_proj + dt_proj folded into ONE matmul:
        #   delta = softplus(xc @ (Wxp[:, :r] @ Wdt) + bdt);  B/C = xc @ Wxp[:, r:]
        w_delta = jnp.dot(lyr["x_proj_w"][:, :dt_rank], lyr["dt_proj_w"])
        w_dbc = jnp.concatenate([w_delta, lyr["x_proj_w"][:, dt_rank:]], axis=1)
        b_dbc = jnp.concatenate(
            [lyr["dt_proj_b"].reshape(1, d_inner),
             jnp.zeros((1, 2 * d_state), jnp.float32)], axis=1)
        dbc = fused_linear(xc.reshape(n, d_inner), w_dbc, b_dbc,
                           softplus_cols=d_inner, mxu_dtype=mxu_dtype)
        delta = dbc[:, :d_inner].reshape(bsz, l, d_inner)
        bm = dbc[:, d_inner:d_inner + d_state].reshape(bsz, l, d_state)
        cm = dbc[:, d_inner + d_state:].reshape(bsz, l, d_state)

        y = selective_scan_gate(xc, delta, lyr["A"], bm, cm, lyr["D"], res)

        # out_proj + residual + norm1 fused
        xr = mm_residual_layernorm(y.reshape(n, d_inner), lyr["out_proj_w"],
                                   None, xr, lyr["norm1_g"], lyr["norm1_b"],
                                   mxu_dtype=mxu_dtype)

        # ---- causal self-attention -------------------------------------------
        wqkv = jnp.concatenate([lyr["wq"], lyr["wk"], lyr["wv"]], axis=1)
        bqkv = jnp.concatenate([lyr["bq"], lyr["bk"], lyr["bv"]], axis=1)
        qkv = fused_linear(xr, wqkv, bqkv, mxu_dtype=mxu_dtype)
        a = causal_attention_fused(qkv.reshape(bsz, l, 3 * d_model), n_heads,
                                   mxu_dtype=mxu_dtype).reshape(n, d_model)
        # attention out-projection + residual + norm2 fused
        xr = mm_residual_layernorm(a, lyr["wo"], lyr["bo"], xr,
                                   lyr["norm2_g"], lyr["norm2_b"],
                                   mxu_dtype=mxu_dtype)
        x = xr.reshape(bsz, l, d_model)

    return x


# ----------------------------------------------------------------------------
# Pure-JAX reference (original PyTorch math, un-fused) for the self-check
# ----------------------------------------------------------------------------
_HI = jax.lax.Precision.HIGHEST


def _dwconv_silu_ref(x, wk, bias):
    _, l, _ = x.shape
    k = wk.shape[0]
    xp = jnp.pad(x, ((0, 0), (k - 1, 0), (0, 0)))
    acc = sum(xp[:, i:i + l, :] * wk[i][None, None, :] for i in range(k))
    acc = acc + bias.reshape(1, 1, -1)
    return acc * jax.nn.sigmoid(acc)


def _selective_scan_gate_ref(u, delta, A, Bm, Cm, D, res):
    bsz, l, d_in = u.shape
    x = jnp.zeros((bsz, d_in, A.shape[1]), jnp.float32)
    ys = []
    for t in range(l):
        da = jnp.exp(delta[:, t, :, None] * A[None, :, :])
        dbu = delta[:, t, :, None] * u[:, t, :, None] * Bm[:, t, None, :]
        x = da * x + dbu
        ys.append(jnp.sum(x * Cm[:, t, None, :], axis=-1))
    y = jnp.stack(ys, axis=1) + u * D.reshape(1, 1, -1)
    return y * (res * jax.nn.sigmoid(res))


def _attention_ref(q, k, v):
    _, l, _, e = q.shape
    s = jnp.einsum("blhe,bshe->bhls", q, k, precision=_HI)
    causal = jnp.arange(l)[None, :] > jnp.arange(l)[:, None]
    s = jnp.where(causal[None, None, :, :], -1e30, s) * (1.0 / math.sqrt(e))
    p = jax.nn.softmax(s, axis=-1)
    return jnp.einsum("bhls,bshe->blhe", p, v, precision=_HI)


def _add_layernorm_ref(x, y, g, b):
    s = x + y
    mu = jnp.mean(s, axis=-1, keepdims=True)
    var = jnp.mean((s - mu) ** 2, axis=-1, keepdims=True)
    return (s - mu) / jnp.sqrt(var + 1e-5) * g + b


def data_embedding_ref(params, x_dec, visit_len, x_mark_dec):
    bsz, l, c_in = x_dec.shape
    d_model = params["token_w"].shape[1]
    n = bsz * l
    xpad = jnp.concatenate([x_dec[:, -1:, :], x_dec, x_dec[:, :1, :]], axis=1)
    u = jnp.concatenate([xpad[:, k:k + l, :] for k in range(3)], axis=-1)
    x1 = jnp.dot(u.reshape(n, 3 * c_in), params["token_w"],
                 precision=_HI).reshape(bsz, l, d_model)
    idx4 = x_mark_dec.astype(jnp.int32) + params["temporal_offsets"][None, None, :]
    x2 = params["temporal_table"][idx4].sum(axis=2)
    pos_ids = jnp.where(jnp.arange(l)[None, :] < visit_len[:, None],
                        jnp.arange(1, l + 1, dtype=jnp.int32)[None, :], 0)
    x3 = params["pos_table"][pos_ids]
    return x1 + x2 + x3


def ma_model_forward_ref(params, x_dec, visit_len, x_mark_dec, *, cfg):
    d_model, d_inner = cfg["d_model"], cfg["d_inner"]
    d_state, dt_rank, n_heads = cfg["d_state"], cfg["dt_rank"], cfg["n_heads"]
    bsz, l, _ = x_dec.shape
    n = bsz * l
    x = data_embedding_ref(params, x_dec, visit_len, x_mark_dec)
    for lyr in params["layers"]:
        xr = x.reshape(n, d_model)
        x_and_res = jnp.dot(xr, lyr["in_proj_w"], precision=_HI)
        xi = x_and_res[:, :d_inner].reshape(bsz, l, d_inner)
        res = x_and_res[:, d_inner:].reshape(bsz, l, d_inner)
        xc = _dwconv_silu_ref(xi, lyr["conv_w"], lyr["conv_b"])
        x_dbl = jnp.dot(xc.reshape(n, d_inner), lyr["x_proj_w"], precision=_HI)
        dt_pre = jnp.dot(x_dbl[:, :dt_rank], lyr["dt_proj_w"],
                         precision=_HI) + lyr["dt_proj_b"]
        delta = _softplus(dt_pre).reshape(bsz, l, d_inner)
        bm = x_dbl[:, dt_rank:dt_rank + d_state].reshape(bsz, l, d_state)
        cm = x_dbl[:, dt_rank + d_state:].reshape(bsz, l, d_state)
        y = _selective_scan_gate_ref(xc, delta, lyr["A"], bm, cm, lyr["D"], res)
        mamba_out = jnp.dot(y.reshape(n, d_inner), lyr["out_proj_w"], precision=_HI)
        xr = _add_layernorm_ref(xr, mamba_out, lyr["norm1_g"], lyr["norm1_b"])
        q = (jnp.dot(xr, lyr["wq"], precision=_HI) + lyr["bq"]).reshape(bsz, l, n_heads, -1)
        k = (jnp.dot(xr, lyr["wk"], precision=_HI) + lyr["bk"]).reshape(bsz, l, n_heads, -1)
        v = (jnp.dot(xr, lyr["wv"], precision=_HI) + lyr["bv"]).reshape(bsz, l, n_heads, -1)
        a = _attention_ref(q, k, v).reshape(n, d_model)
        attn_out = jnp.dot(a, lyr["wo"], precision=_HI) + lyr["bo"]
        xr = _add_layernorm_ref(xr, attn_out, lyr["norm2_g"], lyr["norm2_b"])
        x = xr.reshape(bsz, l, d_model)
    return x


# ----------------------------------------------------------------------------
# deterministic parameter construction
# ----------------------------------------------------------------------------
def init_params(key, cfg):
    d_model, c_in = cfg["d_model"], cfg["dec_in"]
    d_inner, d_state = cfg["d_inner"], cfg["d_state"]
    dt_rank, d_conv = cfg["dt_rank"], cfg["d_conv"]
    max_len, n_layers = cfg["max_len"], cfg["d_layers"]

    keys = iter(jax.random.split(key, 64))

    def dense(k_in, k_out):
        return jax.random.normal(next(keys), (k_in, k_out), jnp.float32) / math.sqrt(k_in)

    # TemporalEmbedding tables: [month(13), day(32), weekday(7), hour(24)] fused
    temporal_table = jnp.concatenate(
        [fixed_embedding_table(13, d_model), fixed_embedding_table(32, d_model),
         fixed_embedding_table(7, d_model), fixed_embedding_table(24, d_model)], axis=0)
    temporal_offsets = jnp.array([0, 13, 13 + 32, 13 + 32 + 7], dtype=jnp.int32)

    params = {
        "token_w": dense(3 * c_in, d_model),     # circular conv as unfold-matmul
        "temporal_table": temporal_table,
        "temporal_offsets": temporal_offsets,
        "pos_table": positional_table(max_len, d_model),
        "layers": [],
    }
    for _ in range(n_layers):
        lyr = {
            "in_proj_w": dense(d_model, 2 * d_inner),
            "conv_w": jax.random.normal(next(keys), (d_conv, d_inner),
                                        jnp.float32) / math.sqrt(d_conv),
            "conv_b": jnp.zeros((1, d_inner), jnp.float32),
            "x_proj_w": dense(d_inner, dt_rank + 2 * d_state),
            "dt_proj_w": dense(dt_rank, d_inner),
            "dt_proj_b": 0.1 * jax.random.normal(next(keys), (1, d_inner), jnp.float32),
            "A": -jnp.broadcast_to(jnp.arange(1, d_state + 1, dtype=jnp.float32),
                                   (d_inner, d_state)),
            "D": jnp.ones((1, d_inner), jnp.float32),
            "out_proj_w": dense(d_inner, d_model),
            "wq": dense(d_model, d_model), "bq": jnp.zeros((1, d_model), jnp.float32),
            "wk": dense(d_model, d_model), "bk": jnp.zeros((1, d_model), jnp.float32),
            "wv": dense(d_model, d_model), "bv": jnp.zeros((1, d_model), jnp.float32),
            "wo": dense(d_model, d_model), "bo": jnp.zeros((1, d_model), jnp.float32),
            "norm1_g": jnp.ones((1, d_model), jnp.float32),
            "norm1_b": jnp.zeros((1, d_model), jnp.float32),
            "norm2_g": jnp.ones((1, d_model), jnp.float32),
            "norm2_b": jnp.zeros((1, d_model), jnp.float32),
        }
        params["layers"].append(lyr)
    return params


# ----------------------------------------------------------------------------
if __name__ == "__main__":
    cfg = dict(d_model=32, dec_in=4, d_state=8, d_conv=4, n_heads=4, d_layers=1,
               dt_rank=math.ceil(32 / 16), d_inner=2 * 32, max_len=500)
    B, L = 2, 8

    params = init_params(jax.random.PRNGKey(0), cfg)

    k1, k2, k3, k4, k5 = jax.random.split(jax.random.PRNGKey(0), 5)
    x_dec = jax.random.normal(k1, (B, L, cfg["dec_in"]), jnp.float32)
    visit_len = jnp.array([L, 5], dtype=jnp.int32)
    x_mark_dec = jnp.concatenate(
        [jax.random.randint(k2, (B, L, 1), 0, 13),    # month
         jax.random.randint(k3, (B, L, 1), 0, 32),    # day
         jax.random.randint(k4, (B, L, 1), 0, 7),     # weekday
         jax.random.randint(k5, (B, L, 1), 0, 24)],   # hour
        axis=-1).astype(jnp.int32)

    # Pure-JAX reference of the original (un-fused) PyTorch forward math.
    ref = jax.block_until_ready(
        ma_model_forward_ref(params, x_dec, visit_len, x_mark_dec, cfg=cfg))

    # Unit check of the fused embedding kernel (f32 exact row selects).
    emb = jax.block_until_ready(
        data_embedding_pallas(params, x_dec, visit_len, x_mark_dec))
    emb_ref = data_embedding_ref(params, x_dec, visit_len, x_mark_dec)
    assert emb.shape == (B, L, cfg["d_model"])
    assert jnp.allclose(emb, emb_ref, atol=1e-3, rtol=1e-3), "embedding mismatch"

    # Full Pallas forward, f32 MXU operands (tight check).
    fwd_f32 = jax.jit(functools.partial(ma_model_forward, cfg=cfg,
                                        mxu_dtype=jnp.float32))
    out = jax.block_until_ready(fwd_f32(params, x_dec, visit_len, x_mark_dec))
    assert out.shape == (B, L, cfg["d_model"])
    assert bool(jnp.all(jnp.isfinite(out)))
    assert jnp.allclose(out, ref, atol=2e-2, rtol=2e-2), (
        f"f32 path max diff {float(jnp.max(jnp.abs(out - ref)))}")

    # Full Pallas forward, bf16 MXU operands (v6e/v7x fast path; f32 accumulate
    # and f32 elementwise, so only weight/activation rounding differs).
    fwd_bf16 = jax.jit(functools.partial(ma_model_forward, cfg=cfg,
                                         mxu_dtype=jnp.bfloat16))
    out_bf16 = jax.block_until_ready(fwd_bf16(params, x_dec, visit_len, x_mark_dec))
    assert bool(jnp.all(jnp.isfinite(out_bf16)))
    assert jnp.allclose(out_bf16, ref, atol=1e-1, rtol=1e-1), (
        f"bf16 path max diff {float(jnp.max(jnp.abs(out_bf16 - ref)))}")

    print("KERNEL_OK")
</pallas_src>

<mosaic_0001>
module attributes {stable_mosaic.version = 11 : i64} {
  func.func @_embed_kernel(%arg0: i32, %arg1: memref<8x12xf32, #tpu.memory_space<vmem>>, %arg2: memref<12x32xf32, #tpu.memory_space<vmem>>, %arg3: memref<8x8xi32, #tpu.memory_space<vmem>>, %arg4: memref<80x32xf32, #tpu.memory_space<vmem>>, %arg5: memref<504x32xf32, #tpu.memory_space<vmem>>, %arg6: memref<8x32xf32, #tpu.memory_space<vmem>>) attributes {dimension_semantics = [#tpu.dimension_semantics<parallel>], iteration_bounds = array<i64: 2>, scalar_prefetch = 0 : i64, scratch_operands = 0 : i64, tpu.core_type = #tpu.core_type<tc>, window_params = [{transform_indices = @transform_0, window_bounds = array<i64: 8, 12>}, {pipeline_mode = #tpu.pipeline_mode<synchronous>, transform_indices = @transform_1, window_bounds = array<i64: 12, 32>}, {transform_indices = @transform_2, window_bounds = array<i64: 8, 8>}, {pipeline_mode = #tpu.pipeline_mode<synchronous>, transform_indices = @transform_3, window_bounds = array<i64: 80, 32>}, {pipeline_mode = #tpu.pipeline_mode<synchronous>, transform_indices = @transform_4, window_bounds = array<i64: 504, 32>}, {transform_indices = @transform_5, window_bounds = array<i64: 8, 32>}]} {
    %c0 = arith.constant 0 : index
    %c0_0 = arith.constant 0 : index
    %0 = vector.load %arg1[%c0, %c0_0] : memref<8x12xf32, #tpu.memory_space<vmem>>, vector<8x12xf32>
    %c0_1 = arith.constant 0 : index
    %c0_2 = arith.constant 0 : index
    %1 = vector.load %arg2[%c0_1, %c0_2] : memref<12x32xf32, #tpu.memory_space<vmem>>, vector<12x32xf32>
    %cst = arith.constant dense<0.000000e+00> : vector<8x32xf32>
    %2 = tpu.matmul %0, %1, %cst {dimension_numbers = #tpu.dot_dimension_numbers<[1], [0], [0], [1], [0, 0, 1, 1], [], []>} : vector<8x12xf32>, vector<12x32xf32>, vector<8x32xf32> -> vector<8x32xf32>
    %c0_3 = arith.constant 0 : index
    %c0_4 = arith.constant 0 : index
    %3 = vector.load %arg3[%c0_3, %c0_4] : memref<8x8xi32, #tpu.memory_space<vmem>>, vector<8x8xi32>
    %4 = tpu.iota {dimensions = array<i32: 1>} : vector<8x80xi32>
    %cst_5 = arith.constant 0.000000e+00 : f32
    %5 = vector.broadcast %cst_5 : f32 to vector<8x80xf32>
    %6 = vector.extract_strided_slice %3 {offsets = [0, 0], sizes = [8, 1], strides = [1, 1]} : vector<8x8xi32> to vector<8x1xi32>
    %7 = vector.broadcast %6 : vector<8x1xi32> to vector<8x80xi32>
    %8 = arith.cmpi eq, %7, %4 : vector<8x80xi32>
    %9 = arith.extui %8 : vector<8x80xi1> to vector<8x80xi32>
    %10 = arith.sitofp %9 : vector<8x80xi32> to vector<8x80xf32>
    %11 = arith.addf %5, %10 : vector<8x80xf32>
    %12 = vector.extract_strided_slice %3 {offsets = [0, 1], sizes = [8, 1], strides = [1, 1]} : vector<8x8xi32> to vector<8x1xi32>
    %13 = vector.broadcast %12 : vector<8x1xi32> to vector<8x80xi32>
    %14 = arith.cmpi eq, %13, %4 : vector<8x80xi32>
    %15 = arith.extui %14 : vector<8x80xi1> to vector<8x80xi32>
    %16 = arith.sitofp %15 : vector<8x80xi32> to vector<8x80xf32>
    %17 = arith.addf %11, %16 : vector<8x80xf32>
    %18 = vector.extract_strided_slice %3 {offsets = [0, 2], sizes = [8, 1], strides = [1, 1]} : vector<8x8xi32> to vector<8x1xi32>
    %19 = vector.broadcast %18 : vector<8x1xi32> to vector<8x80xi32>
    %20 = arith.cmpi eq, %19, %4 : vector<8x80xi32>
    %21 = arith.extui %20 : vector<8x80xi1> to vector<8x80xi32>
    %22 = arith.sitofp %21 : vector<8x80xi32> to vector<8x80xf32>
    %23 = arith.addf %17, %22 : vector<8x80xf32>
    %24 = vector.extract_strided_slice %3 {offsets = [0, 3], sizes = [8, 1], strides = [1, 1]} : vector<8x8xi32> to vector<8x1xi32>
    %25 = vector.broadcast %24 : vector<8x1xi32> to vector<8x80xi32>
    %26 = arith.cmpi eq, %25, %4 : vector<8x80xi32>
    %27 = arith.extui %26 : vector<8x80xi1> to vector<8x80xi32>
    %28 = arith.sitofp %27 : vector<8x80xi32> to vector<8x80xf32>
    %29 = arith.addf %23, %28 : vector<8x80xf32>
    %c0_6 = arith.constant 0 : index
    %c0_7 = arith.constant 0 : index
    %30 = vector.load %arg4[%c0_6, %c0_7] : memref<80x32xf32, #tpu.memory_space<vmem>>, vector<80x32xf32>
    %cst_8 = arith.constant dense<0.000000e+00> : vector<8x32xf32>
    %31 = tpu.matmul %29, %30, %cst_8 {dimension_numbers = #tpu.dot_dimension_numbers<[1], [0], [0], [1], [0, 0, 1, 1], [], []>} : vector<8x80xf32>, vector<80x32xf32>, vector<8x32xf32> -> vector<8x32xf32>
    %32 = tpu.iota {dimensions = array<i32: 1>} : vector<8x504xi32>
    %33 = vector.extract_strided_slice %3 {offsets = [0, 4], sizes = [8, 1], strides = [1, 1]} : vector<8x8xi32> to vector<8x1xi32>
    %34 = vector.broadcast %33 : vector<8x1xi32> to vector<8x504xi32>
    %35 = arith.cmpi eq, %34, %32 : vector<8x504xi32>
    %36 = arith.extui %35 : vector<8x504xi1> to vector<8x504xi32>
    %37 = arith.sitofp %36 : vector<8x504xi32> to vector<8x504xf32>
    %c0_9 = arith.constant 0 : index
    %c0_10 = arith.constant 0 : index
    %38 = vector.load %arg5[%c0_9, %c0_10] : memref<504x32xf32, #tpu.memory_space<vmem>>, vector<504x32xf32>
    %cst_11 = arith.constant dense<0.000000e+00> : vector<8x32xf32>
    %39 = tpu.matmul %37, %38, %cst_11 {dimension_numbers = #tpu.dot_dimension_numbers<[1], [0], [0], [1], [0, 0, 1, 1], [], []>} : vector<8x504xf32>, vector<504x32xf32>, vector<8x32xf32> -> vector<8x32xf32>
    %40 = arith.addf %2, %31 : vector<8x32xf32>
    %41 = arith.addf %40, %39 : vector<8x32xf32>
    %c0_12 = arith.constant 0 : index
    %c0_13 = arith.constant 0 : index
    %42 = vector.load %arg6[%c0_12, %c0_13] : memref<8x32xf32, #tpu.memory_space<vmem>>, vector<8x32xf32>
    tpu.vector_store %arg6[%c0_12, %c0_13], %41 {strides = array<i32>} : memref<8x32xf32, #tpu.memory_space<vmem>>, vector<8x32xf32>,
    return
  }
  func.func @transform_0(%arg0: i32) -> (i32, i32) {
    %c0_i32 = arith.constant 0 : i32
    %c0_i32_0 = arith.constant 0 : i32
    return %arg0, %c0_i32 : i32, i32
  }
  func.func @transform_1(%arg0: i32) -> (i32, i32) {
    %c0_i32 = arith.constant 0 : i32
    %c0_i32_0 = arith.constant 0 : i32
    %c0_i32_1 = arith.constant 0 : i32
    return %c0_i32, %c0_i32_0 : i32, i32
  }
  func.func @transform_2(%arg0: i32) -> (i32, i32) {
    %c0_i32 = arith.constant 0 : i32
    %c0_i32_0 = arith.constant 0 : i32
    return %arg0, %c0_i32 : i32, i32
  }
  func.func @transform_3(%arg0: i32) -> (i32, i32) {
    %c0_i32 = arith.constant 0 : i32
    %c0_i32_0 = arith.constant 0 : i32
    %c0_i32_1 = arith.constant 0 : i32
    return %c0_i32, %c0_i32_0 : i32, i32
  }
  func.func @transform_4(%arg0: i32) -> (i32, i32) {
    %c0_i32 = arith.constant 0 : i32
    %c0_i32_0 = arith.constant 0 : i32
    %c0_i32_1 = arith.constant 0 : i32
    return %c0_i32, %c0_i32_0 : i32, i32
  }
  func.func @transform_5(%arg0: i32) -> (i32, i32) {
    %c0_i32 = arith.constant 0 : i32
    %c0_i32_0 = arith.constant 0 : i32
    return %arg0, %c0_i32 : i32, i32
  }
}

</mosaic_0001>

<llo_original>
// kernel: tpu_custom_call.1
$region0: #{tpu_custom_call.1}
  #allocation0 [shape = 'u32[]', space=smem, size = 0x4, offset = 0x4, fixed_abs, tag = 'smem constant byte address 0x4 - core index']
  #allocation1 [shape = 'u32[144,128]{1,0:T(1,128)}', space=vmem, size = 0x12000, scoped, tag = 'internal scratch']
  %s0 = inlined_call_operand.vmem [shape: f32[16,12], index: 0, kind: input, shape index: {}]
  %s1 = inlined_call_operand.vmem [shape: f32[12,32], index: 1, kind: input, shape index: {}]
  %s2 = inlined_call_operand.vmem [shape: s32[16,8], index: 2, kind: input, shape index: {}]
  %s3 = inlined_call_operand.vmem [shape: f32[80,32], index: 3, kind: input, shape index: {}]
  %s4 = inlined_call_operand.vmem [shape: f32[504,32], index: 4, kind: input, shape index: {}]
  %s5 = inlined_call_operand.hbm [shape: f32[16,32], index: 5, kind: output, shape index: {}]
  %s6 = sld [smem:[#allocation0]]
  $region53: #{tpu_custom_call.1} parent=0
    _
  %s8 = ssub.s32 1, %s6
  %s9 = scalar_select 0, %s8, %s6
  $region1: #{tpu_custom_call.1} parent=0
    #allocation2 [shape = 'u8[8192]{0}', space=vmem, size = 0x2000, scoped, tag = 'output window, operand 0']
    #allocation3 [shape = 's32[2]{0}', space=sflag, size = 0x8, scoped, tag = 'scoped memory for tpu_custom_call.1']
    %10 = vsyncpa [#allocation3], 0
    %s11 = scalar_lea.sflag [#allocation3], 1
    %12 = vsyncpa %s11, 0
    loop: start=0, step=1, limit=4
    $region2: #{tpu_custom_call.1} parent=1 // loop_pre_header
      _
    $region3: #{tpu_custom_call.1} parent=1 // loop_header
      %s14 = sphi 0, %s18
      %p15 = scmp.ge.s32.totalorder %s14, 4
      %s24 = sphi 0, %s26
      %s27 = sphi 0, %s24
      %s28 = sphi 0, %s27
      %s44 = sphi 0, %s28
      %s48 = sphi 0, %s48
      %s50 = sphi 0, %s48
      %s51 = sphi 0, %s50
      %s65 = sphi 0, %s51
      %s71 = sphi 0, %s73
      %s74 = sphi 0, %s71
      %s75 = sphi 0, %s74
      %s91 = sphi 0, %s75
      %s95 = sphi 0, %s95
      %s97 = sphi 0, %s95
      %s98 = sphi 0, %s97
      %s112 = sphi 0, %s98
      %s116 = sphi 0, %s116
      %s118 = sphi 0, %s116
      %s119 = sphi 0, %s118
      %s133 = sphi 0, %s119
      %s139 = sphi 0, %s141
      %s142 = sphi 0, %s139
      %s143 = sphi 0, %s142
      %s159 = sphi 0, %s143
    $region4: #{tpu_custom_call.1} parent=1 // loop_header_branch
      %17 = sbr.rel (%p15) target = $region8
    $region5: #{tpu_custom_call.1} parent=1 // loop_body
      %s19 = ssub.s32 %s14, 1
      %s20 = ssub.s32 %s14, 2
      %s21 = sadd.s32 %s14, 1
      %s22 = ssub.s32 %s14, %s21
      %p23 = scmp.eq.s32.totalorder %s22, 0
      %s25 = sadd.s32 %s24, 1
      %s26 = scalar_select %p23, %s24, %s25
      %p29 = pneg %p23
      %p30 = scmp.eq.s32.totalorder %s14, 1
      %p31 = por %p29, %p30
      %p32 = scmp.ne.s32.totalorder %s24, %s27
      %p33 = scmp.eq.s32.totalorder %s14, 0
      %p34 = por %p32, %p33
      %p35 = scmp.ne.s32.totalorder %s24, %s27
      %p36 = scmp.eq.s32.totalorder %s19, 1
      %p37 = por %p35, %p36
      %p38 = scmp.ne.s32.totalorder %s27, %s28
      %p39 = scmp.eq.s32.totalorder %s19, 0
      %p40 = por %p38, %p39
      %p41 = scmp.ne.s32.totalorder %s27, %s28
      %p42 = scmp.eq.s32.totalorder %s20, 1
      %p43 = por %p41, %p42
      %p45 = scmp.ne.s32.totalorder %s28, %s44
      %p46 = scmp.eq.s32.totalorder %s20, 0
      %p47 = por %p45, %p46
      %s49 = sadd.s32 %s48, 1
      %p52 = scmp.eq.s32.totalorder %s14, 1
      %p53 = scmp.ne.s32.totalorder %s48, %s50
      %p54 = scmp.eq.s32.totalorder %s14, 0
      %p55 = por %p53, %p54
      %p56 = scmp.ne.s32.totalorder %s48, %s50
      %p57 = scmp.eq.s32.totalorder %s19, 1
      %p58 = por %p56, %p57
      %p59 = scmp.ne.s32.totalorder %s50, %s51
      %p60 = scmp.eq.s32.totalorder %s19, 0
      %p61 = por %p59, %p60
      %p62 = scmp.ne.s32.totalorder %s50, %s51
      %p63 = scmp.eq.s32.totalorder %s20, 1
      %p64 = por %p62, %p63
      %p66 = scmp.ne.s32.totalorder %s51, %s65
      %p67 = scmp.eq.s32.totalorder %s20, 0
      %p68 = por %p66, %p67
      %s69 = ssub.s32 %s14, %s21
      %p70 = scmp.eq.s32.totalorder %s69, 0
      %s72 = sadd.s32 %s71, 1
      %s73 = scalar_select %p70, %s71, %s72
      %p76 = pneg %p70
      %p77 = scmp.eq.s32.totalorder %s14, 1
      %p78 = por %p76, %p77
      %p79 = scmp.ne.s32.totalorder %s71, %s74
      %p80 = scmp.eq.s32.totalorder %s14, 0
      %p81 = por %p79, %p80
      %p82 = scmp.ne.s32.totalorder %s71, %s74
      %p83 = scmp.eq.s32.totalorder %s19, 1
      %p84 = por %p82, %p83
      %p85 = scmp.ne.s32.totalorder %s74, %s75
      %p86 = scmp.eq.s32.totalorder %s19, 0
      %p87 = por %p85, %p86
      %p88 = scmp.ne.s32.totalorder %s74, %s75
      %p89 = scmp.eq.s32.totalorder %s20, 1
      %p90 = por %p88, %p89
      %p92 = scmp.ne.s32.totalorder %s75, %s91
      %p93 = scmp.eq.s32.totalorder %s20, 0
      %p94 = por %p92, %p93
      %s96 = sadd.s32 %s95, 1
      %p99 = scmp.eq.s32.totalorder %s14, 1
      %p100 = scmp.ne.s32.totalorder %s95, %s97
      %p101 = scmp.eq.s32.totalorder %s14, 0
      %p102 = por %p100, %p101
      %p103 = scmp.ne.s32.totalorder %s95, %s97
      %p104 = scmp.eq.s32.totalorder %s19, 1
      %p105 = por %p103, %p104
      %p106 = scmp.ne.s32.totalorder %s97, %s98
      %p107 = scmp.eq.s32.totalorder %s19, 0
      %p108 = por %p106, %p107
      %p109 = scmp.ne.s32.totalorder %s97, %s98
      %p110 = scmp.eq.s32.totalorder %s20, 1
      %p111 = por %p109, %p110
      %p113 = scmp.ne.s32.totalorder %s98, %s112
      %p114 = scmp.eq.s32.totalorder %s20, 0
      %p115 = por %p113, %p114
      %s117 = sadd.s32 %s116, 1
      %p120 = scmp.eq.s32.totalorder %s14, 1
      %p121 = scmp.ne.s32.totalorder %s116, %s118
      %p122 = scmp.eq.s32.totalorder %s14, 0
      %p123 = por %p121, %p122
      %p124 = scmp.ne.s32.totalorder %s116, %s118
      %p125 = scmp.eq.s32.totalorder %s19, 1
      %p126 = por %p124, %p125
      %p127 = scmp.ne.s32.totalorder %s118, %s119
      %p128 = scmp.eq.s32.totalorder %s19, 0
      %p129 = por %p127, %p128
      %p130 = scmp.ne.s32.totalorder %s118, %s119
      %p131 = scmp.eq.s32.totalorder %s20, 1
      %p132 = por %p130, %p131
      %p134 = scmp.ne.s32.totalorder %s119, %s133
      %p135 = scmp.eq.s32.totalorder %s20, 0
      %p136 = por %p134, %p135
      %s137 = ssub.s32 %s14, %s21
      %p138 = scmp.eq.s32.totalorder %s137, 0
      %s140 = sadd.s32 %s139, 1
      %s141 = scalar_select %p138, %s139, %s140
      %p144 = pneg %p138
      %p145 = scmp.eq.s32.totalorder %s14, 1
      %p146 = por %p144, %p145
      %p147 = scmp.ne.s32.totalorder %s139, %s142
      %p148 = scmp.eq.s32.totalorder %s14, 0
      %p149 = por %p147, %p148
      %p150 = scmp.ne.s32.totalorder %s139, %s142
      %p151 = scmp.eq.s32.totalorder %s19, 1
      %p152 = por %p150, %p151
      %p153 = scmp.ne.s32.totalorder %s142, %s143
      %p154 = scmp.eq.s32.totalorder %s19, 0
      %p155 = por %p153, %p154
      %p156 = scmp.ne.s32.totalorder %s142, %s143
      %p157 = scmp.eq.s32.totalorder %s20, 1
      %p158 = por %p156, %p157
      %p160 = scmp.ne.s32.totalorder %s143, %s159
      %p161 = scmp.eq.s32.totalorder %s20, 0
      %p162 = por %p160, %p161
      %p163 = scmp.le.s32.totalorder 1, %s14
      %p164 = scmp.lt.s32.totalorder %s14, 3
      %p165 = pnand %p163, %p164
      %p166 = pneg %p165
      // Predicated region
      $region9: #{tpu_custom_call.1} parent=5 // pred_check
        _
      $region10: #{tpu_custom_call.1} parent=5 // pred_check_branch
        %168 = sbr.rel (%p165) target = $region12
      $region11: #{tpu_custom_call.1} parent=5 // pred_region
        %s169 = ssub.s32 %s14, 1
        // Predicated region
        $region13: #{tpu_custom_call.1} parent=11 // pred_check
          %p170 = pneg %p61
        $region14: #{tpu_custom_call.1} parent=11 // pred_check_branch
          %172 = sbr.rel (%p170) target = $region16
        $region15: #{tpu_custom_call.1} parent=11 // pred_region
          _
        $region16: #{tpu_custom_call.1} parent=11 // pred_fallthru
          _
        // Predicated region
        $region17: #{tpu_custom_call.1} parent=11 // pred_check
          %p173 = pneg %p108
        $region18: #{tpu_custom_call.1} parent=11 // pred_check_branch
          %175 = sbr.rel (%p173) target = $region20
        $region19: #{tpu_custom_call.1} parent=11 // pred_region
          _
        $region20: #{tpu_custom_call.1} parent=11 // pred_fallthru
          _
        // Predicated region
        $region21: #{tpu_custom_call.1} parent=11 // pred_check
          %p176 = pneg %p129
        $region22: #{tpu_custom_call.1} parent=11 // pred_check_branch
          %178 = sbr.rel (%p176) target = $region24
        $region23: #{tpu_custom_call.1} parent=11 // pred_region
          _
        $region24: #{tpu_custom_call.1} parent=11 // pred_fallthru
          _
      $region12: #{tpu_custom_call.1} parent=5 // pred_fallthru
        _
      %p179 = scmp.lt.s32.totalorder %s14, 2
      // Predicated region
      $region25: #{tpu_custom_call.1} parent=5 // pred_check
        %p180 = pneg %p179
      $region26: #{tpu_custom_call.1} parent=5 // pred_check_branch
        %182 = sbr.rel (%p180) target = $region28
      $region27: #{tpu_custom_call.1} parent=5 // pred_region
        // Predicated region
        $region29: #{tpu_custom_call.1} parent=27 // pred_check
          %p183 = pneg %p34
        $region30: #{tpu_custom_call.1} parent=27 // pred_check_branch
          %185 = sbr.rel (%p183) target = $region32
        $region31: #{tpu_custom_call.1} parent=27 // pred_region
          %p186 = scmp.lt.s32.totalorder %s14, 1
          %s187 = scalar_select %p186, %s14, 1
          %s188 = smul.addr %s187, 8
          %s189 = scalar_lea.vmem %s0, %s188
        $region32: #{tpu_custom_call.1} parent=27 // pred_fallthru
          _
        // Predicated region
        $region33: #{tpu_custom_call.1} parent=27 // pred_check
          %p190 = pneg %p81
        $region34: #{tpu_custom_call.1} parent=27 // pred_check_branch
          %192 = sbr.rel (%p190) target = $region36
        $region35: #{tpu_custom_call.1} parent=27 // pred_region
          %p193 = scmp.lt.s32.totalorder %s14, 1
          %s194 = scalar_select %p193, %s14, 1
          %s195 = smul.addr %s194, 8
          %s196 = scalar_lea.vmem %s2, %s195
        $region36: #{tpu_custom_call.1} parent=27 // pred_fallthru
          _
      $region28: #{tpu_custom_call.1} parent=5 // pred_fallthru
        _
      %p197 = scmp.le.s32.totalorder 1, %s14
      %p198 = scmp.lt.s32.totalorder %s14, 3
      %p199 = pnand %p197, %p198
      %p200 = pneg %p199
      // Predicated region
      $region37: #{tpu_custom_call.1} parent=5 // pred_check
        _
      $region38: #{tpu_custom_call.1} parent=5 // pred_check_branch
        %202 = sbr.rel (%p199) target = $region40
      $region39: #{tpu_custom_call.1} parent=5 // pred_region
        %s203 = ssub.s32 %s14, 1
        %p204 = scmp.lt.s32.totalorder %s19, 1
        %s205 = scalar_select %p204, %s19, 1
        %s206 = smul.addr %s205, 8
        %s207 = scalar_lea.vmem %s0, %s206
        %p208 = pneg %p40
        %p209 = pneg %p37
        %p210 = pneg %p61
        %p211 = pneg %p58
        %p212 = scmp.lt.s32.totalorder %s19, 1
        %s213 = scalar_select %p212, %s19, 1
        %s214 = smul.addr %s213, 8
        %s215 = scalar_lea.vmem %s2, %s214
        %p216 = pneg %p87
        %p217 = pneg %p84
        %p218 = pneg %p108
        %p219 = pneg %p105
        %p220 = pneg %p129
        %p221 = pneg %p126
        %p222 = pneg %p155
        %p223 = pneg %p152
        %s224 = sand.u32 %s142, 1
        %s225 = scalar_lea.sflag [#allocation3], %s224
        %s226 = sand.u32 %s142, 1
        %s227 = smul.addr %s226, 8
        %s228 = scalar_lea.vmem [#allocation2], %s227
        %p229 = scmp.lt.s32.totalorder %s19, 1
        %s230 = scalar_select %p229, %s19, 1
        %s231 = smul.addr %s230, 8
        %s232 = scalar_lea.vmem %s0, %s231
        %p233 = scmp.lt.s32.totalorder %s19, 1
        %s234 = scalar_select %p233, %s19, 1
        %s235 = smul.addr %s234, 8
        %s236 = scalar_lea.vmem %s2, %s235
        %v237 = vld [vmem:[%s232] sm:$0xff]
        %v238 = vld [vmem:[%s1] sm:$0xff]
        %v239 = vld [vmem:[%s1 + $0x8] sm:$0xf]
        %v240 = vld [vmem:[%s236] sm:$0xff]
        %v241 = vlaneseq
        %v242 = vand.u32 %v241, 127
        %243 = vset.pattern.permute.xlu0 0
        %244 = vperm.xlu0 %243, %v240
        %v245 = vpop.permute.xlu0 %244
        %vm246 = vcmp.eq.s32.totalorder %v245, %v242
        %v247 = vsel %vm246, 1, 0
        %v248 = vcvt.s32.f32 %v247
        %v249 = vadd.f32 %v248, 0.0
        %250 = vset.pattern.permute.xlu0 1
        %251 = vperm.xlu0 %250, %v240
        %v252 = vpop.permute.xlu0 %251
        %vm253 = vcmp.eq.s32.totalorder %v252, %v242
        %v254 = vsel %vm253, 1, 0
        %v255 = vcvt.s32.f32 %v254
        %v256 = vadd.f32 %v249, %v255
        %257 = vset.pattern.permute.xlu0 2
        %258 = vperm.xlu0 %257, %v240
        %v259 = vpop.permute.xlu0 %258
        %vm260 = vcmp.eq.s32.totalorder %v259, %v242
        %v261 = vsel %vm260, 1, 0
        %v262 = vcvt.s32.f32 %v261
        %v263 = vadd.f32 %v256, %v262
        %264 = vset.pattern.permute.xlu0 3
        %265 = vperm.xlu0 %264, %v240
        %v266 = vpop.permute.xlu0 %265
        %vm267 = vcmp.eq.s32.totalorder %v266, %v242
        %v268 = vsel %vm267, 1, 0
        %v269 = vcvt.s32.f32 %v268
        %v270 = vadd.f32 %v263, %v269
        %v271 = vld [vmem:[%s3] sm:$0xff]
        %v272 = vld [vmem:[%s3 + $0x8] sm:$0xff]
        %v273 = vld [vmem:[%s3 + $0x10] sm:$0xff]
        %v274 = vld [vmem:[%s3 + $0x18] sm:$0xff]
        %v275 = vld [vmem:[%s3 + $0x20] sm:$0xff]
        %v276 = vld [vmem:[%s3 + $0x28] sm:$0xff]
        %v277 = vld [vmem:[%s3 + $0x30] sm:$0xff]
        %v278 = vld [vmem:[%s3 + $0x38] sm:$0xff]
        %v279 = vld [vmem:[%s3 + $0x40] sm:$0xff]
        %v280 = vld [vmem:[%s3 + $0x48] sm:$0xff]
        %vm281 = vcmask 654336
        %v283 = vsel %vm281, %v270, 0
        %285 = vmatprep.subr.mxu0 0.0
        %286 = vmatpush1.msra.mxu0 0.0
        %287 = vmatprep.subr.mxu0 0.0
        %288 = vmatpush1.msra.mxu0 0.0
        %289 = vmatprep.subr.mxu0 0.0
        %290 = vmatpush1.msra.mxu0 0.0
        %291 = vmatprep.subr.mxu0 0.0
        %292 = vmatpush1.msra.mxu0 0.0
        %293 = vmatprep.subr.mxu0 0.0
        %294 = vmatpush1.msra.mxu0 0.0
        %295 = vmatprep.subr.mxu0 0.0
        %296 = vmatpush1.msra.mxu0 0.0
        %297 = vmatprep.subr.mxu0 0.0
        %298 = vmatpush1.msra.mxu0 %v280
        %299 = vmatprep.subr.mxu0 0.0
        %300 = vmatpush1.msra.mxu0 %v279
        %301 = vmatprep.subr.mxu0 0.0
        %302 = vmatpush1.msra.mxu0 %v278
        %303 = vmatprep.subr.mxu0 0.0
        %304 = vmatpush1.msra.mxu0 %v277
        %305 = vmatprep.subr.mxu0 0.0
        %306 = vmatpush1.msra.mxu0 %v276
        %307 = vmatprep.subr.mxu0 0.0
        %308 = vmatpush1.msra.mxu0 %v275
        %309 = vmatprep.subr.mxu0 0.0
        %310 = vmatpush1.msra.mxu0 %v274
        %311 = vmatprep.subr.mxu0 0.0
        %312 = vmatpush1.msra.mxu0 %v273
        %313 = vmatprep.subr.mxu0 0.0
        %314 = vmatpush1.msra.mxu0 %v272
        %315 = vmatprep.subr.mxu0 0.0
        %316 = vmatpush1.msra.mxu0 %v271
        %317 = vmatprep.subr.mxu0 0.0
        %318 = vmatpush2.msra.mxu0 0.0
        %319 = vmatprep.subr.mxu0 0.0
        %320 = vmatpush2.msra.mxu0 0.0
        %321 = vmatprep.subr.mxu0 0.0
        %322 = vmatpush2.msra.mxu0 0.0
        %323 = vmatprep.subr.mxu0 0.0
        %324 = vmatpush2.msra.mxu0 0.0
        %325 = vmatprep.subr.mxu0 0.0
        %326 = vmatpush2.msra.mxu0 0.0
        %327 = vmatprep.subr.mxu0 0.0
        %328 = vmatpush2.msra.mxu0 0.0
        %329 = vmatprep.subr.mxu0 0.0
        %330 = vmatpush2.msra.mxu0 0.0
        %331 = vmatprep.subr.mxu0 0.0
        %332 = vmatpush2.msra.mxu0 0.0
        %333 = vmatprep.subr.mxu0 0.0
        %334 = vmatpush2.msra.mxu0 0.0
        %335 = vmatprep.subr.mxu0 0.0
        %336 = vmatpush2.msra.mxu0 0.0
        %337 = vmatprep.subr.mxu0 0.0
        %338 = vmatpush2.msra.mxu0 0.0
        %339 = vmatprep.subr.mxu0 0.0
        %340 = vmatpush2.msra.mxu0 0.0
        %341 = vmatprep.subr.mxu0 0.0
        %342 = vmatpush2.msra.mxu0 0.0
        %343 = vmatprep.subr.mxu0 0.0
        %344 = vmatpush2.msra.mxu0 0.0
        %345 = vmatprep.subr.mxu0 0.0
        %346 = vmatpush2.msra.mxu0 0.0
        %347 = vmatprep.subr.mxu0 0.0
        %348 = vmatpush2.msra.mxu0 0.0
        %349 = vmatprep.mubr.f32.mxu0 0.0
        %350 = vmatmul.mubr.f32.gmra.mxu0 %v283
        %v351 = vpop.f32.mrf.mxu0
        %v352 = vadd.f32 0.0, %v351
        %v353 = vpop.f32.mrf.mxu0
        %354 = vdwg.mxu0
        %v355 = vadd.s32 %v242, 128
        %v356 = vadd.s32 %v242, 256
        %v357 = vadd.s32 %v242, 384
        %358 = vset.pattern.permute.xlu0 4
        %359 = vperm.xlu0 %358, %v240
        %v360 = vpop.permute.xlu0 %359
        %vm361 = vcmp.eq.s32.totalorder %v360, %v242
        %vm362 = vcmp.eq.s32.totalorder %v360, %v355
        %vm363 = vcmp.eq.s32.totalorder %v360, %v356
        %vm364 = vcmp.eq.s32.totalorder %v360, %v357
        %v365 = vsel %vm361, 1, 0
        %v366 = vsel %vm362, 1, 0
        %v367 = vsel %vm363, 1, 0
        %v368 = vsel %vm364, 1, 0
        %v369 = vcvt.s32.f32 %v365
        %v370 = vcvt.s32.f32 %v366
        %v371 = vcvt.s32.f32 %v367
        %v372 = vcvt.s32.f32 %v368
        %v373 = vld [vmem:[%s4] sm:$0xff]
        %v374 = vld [vmem:[%s4 + $0x8] sm:$0xff]
        %v375 = vld [vmem:[%s4 + $0x10] sm:$0xff]
        %v376 = vld [vmem:[%s4 + $0x18] sm:$0xff]
        %v377 = vld [vmem:[%s4 + $0x20] sm:$0xff]
        %v378 = vld [vmem:[%s4 + $0x28] sm:$0xff]
        %v379 = vld [vmem:[%s4 + $0x30] sm:$0xff]
        %v380 = vld [vmem:[%s4 + $0x38] sm:$0xff]
        %v381 = vld [vmem:[%s4 + $0x40] sm:$0xff]
        %v382 = vld [vmem:[%s4 + $0x48] sm:$0xff]
        %v383 = vld [vmem:[%s4 + $0x50] sm:$0xff]
        %v384 = vld [vmem:[%s4 + $0x58] sm:$0xff]
        %v385 = vld [vmem:[%s4 + $0x60] sm:$0xff]
        %v386 = vld [vmem:[%s4 + $0x68] sm:$0xff]
        %v387 = vld [vmem:[%s4 + $0x70] sm:$0xff]
        %v388 = vld [vmem:[%s4 + $0x78] sm:$0xff]
        %v389 = vld [vmem:[%s4 + $0x80] sm:$0xff]
        %v390 = vld [vmem:[%s4 + $0x88] sm:$0xff]
        %v391 = vld [vmem:[%s4 + $0x90] sm:$0xff]
        %v392 = vld [vmem:[%s4 + $0x98] sm:$0xff]
        %v393 = vld [vmem:[%s4 + $0xa0] sm:$0xff]
        %v394 = vld [vmem:[%s4 + $0xa8] sm:$0xff]
        %v395 = vld [vmem:[%s4 + $0xb0] sm:$0xff]
        %v396 = vld [vmem:[%s4 + $0xb8] sm:$0xff]
        %v397 = vld [vmem:[%s4 + $0xc0] sm:$0xff]
        %v398 = vld [vmem:[%s4 + $0xc8] sm:$0xff]
        %v399 = vld [vmem:[%s4 + $0xd0] sm:$0xff]
        %v400 = vld [vmem:[%s4 + $0xd8] sm:$0xff]
        %v401 = vld [vmem:[%s4 + $0xe0] sm:$0xff]
        %v402 = vld [vmem:[%s4 + $0xe8] sm:$0xff]
        %v403 = vld [vmem:[%s4 + $0xf0] sm:$0xff]
        %v404 = vld [vmem:[%s4 + $0xf8] sm:$0xff]
        %v405 = vld [vmem:[%s4 + $0x100] sm:$0xff]
        %v406 = vld [vmem:[%s4 + $0x108] sm:$0xff]
        %v407 = vld [vmem:[%s4 + $0x110] sm:$0xff]
        %v408 = vld [vmem:[%s4 + $0x118] sm:$0xff]
        %v409 = vld [vmem:[%s4 + $0x120] sm:$0xff]
        %v410 = vld [vmem:[%s4 + $0x128] sm:$0xff]
        %v411 = vld [vmem:[%s4 + $0x130] sm:$0xff]
        %v412 = vld [vmem:[%s4 + $0x138] sm:$0xff]
        %v413 = vld [vmem:[%s4 + $0x140] sm:$0xff]
        %v414 = vld [vmem:[%s4 + $0x148] sm:$0xff]
        %v415 = vld [vmem:[%s4 + $0x150] sm:$0xff]
        %v416 = vld [vmem:[%s4 + $0x158] sm:$0xff]
        %v417 = vld [vmem:[%s4 + $0x160] sm:$0xff]
        %v418 = vld [vmem:[%s4 + $0x168] sm:$0xff]
        %v419 = vld [vmem:[%s4 + $0x170] sm:$0xff]
        %v420 = vld [vmem:[%s4 + $0x178] sm:$0xff]
        %v421 = vld [vmem:[%s4 + $0x180] sm:$0xff]
        %v422 = vld [vmem:[%s4 + $0x188] sm:$0xff]
        %v423 = vld [vmem:[%s4 + $0x190] sm:$0xff]
        %v424 = vld [vmem:[%s4 + $0x198] sm:$0xff]
        %v425 = vld [vmem:[%s4 + $0x1a0] sm:$0xff]
        %v426 = vld [vmem:[%s4 + $0x1a8] sm:$0xff]
        %v427 = vld [vmem:[%s4 + $0x1b0] sm:$0xff]
        %v428 = vld [vmem:[%s4 + $0x1b8] sm:$0xff]
        %v429 = vld [vmem:[%s4 + $0x1c0] sm:$0xff]
        %v430 = vld [vmem:[%s4 + $0x1c8] sm:$0xff]
        %v431 = vld [vmem:[%s4 + $0x1d0] sm:$0xff]
        %v432 = vld [vmem:[%s4 + $0x1d8] sm:$0xff]
        %v433 = vld [vmem:[%s4 + $0x1e0] sm:$0xff]
        %v434 = vld [vmem:[%s4 + $0x1e8] sm:$0xff]
        %v435 = vld [vmem:[%s4 + $0x1f0] sm:$0xff]
        %vm436 = vcmask 982016
        %v438 = vsel %vm436, %v372, 0
        %440 = vmatprep.subr.mxu0 0.0
        %441 = vmatpush1.msra.mxu0 %v388
        %442 = vmatprep.subr.mxu0 0.0
        %443 = vmatpush1.msra.mxu0 %v387
        %444 = vmatprep.subr.mxu0 0.0
        %445 = vmatpush1.msra.mxu0 %v386
        %446 = vmatprep.subr.mxu0 0.0
        %447 = vmatpush1.msra.mxu0 %v385
        %448 = vmatprep.subr.mxu0 0.0
        %449 = vmatpush1.msra.mxu0 %v384
        %450 = vmatprep.subr.mxu0 0.0
        %451 = vmatpush1.msra.mxu0 %v383
        %452 = vmatprep.subr.mxu0 0.0
        %453 = vmatpush1.msra.mxu0 %v382
        %454 = vmatprep.subr.mxu0 0.0
        %455 = vmatpush1.msra.mxu0 %v381
        %456 = vmatprep.subr.mxu0 0.0
        %457 = vmatpush1.msra.mxu0 %v380
        %458 = vmatprep.subr.mxu0 0.0
        %459 = vmatpush1.msra.mxu0 %v379
        %460 = vmatprep.subr.mxu0 0.0
        %461 = vmatpush1.msra.mxu0 %v378
        %462 = vmatprep.subr.mxu0 0.0
        %463 = vmatpush1.msra.mxu0 %v377
        %464 = vmatprep.subr.mxu0 0.0
        %465 = vmatpush1.msra.mxu0 %v376
        %466 = vmatprep.subr.mxu0 0.0
        %467 = vmatpush1.msra.mxu0 %v375
        %468 = vmatprep.subr.mxu0 0.0
        %469 = vmatpush1.msra.mxu0 %v374
        %470 = vmatprep.subr.mxu0 0.0
        %471 = vmatpush1.msra.mxu0 %v373
        %472 = vmatprep.subr.mxu0 0.0
        %473 = vmatpush2.msra.mxu0 %v404
        %474 = vmatprep.subr.mxu0 0.0
        %475 = vmatpush2.msra.mxu0 %v403
        %476 = vmatprep.subr.mxu0 0.0
        %477 = vmatpush2.msra.mxu0 %v402
        %478 = vmatprep.subr.mxu0 0.0
        %479 = vmatpush2.msra.mxu0 %v401
        %480 = vmatprep.subr.mxu0 0.0
        %481 = vmatpush2.msra.mxu0 %v400
        %482 = vmatprep.subr.mxu0 0.0
        %483 = vmatpush2.msra.mxu0 %v399
        %484 = vmatprep.subr.mxu0 0.0
        %485 = vmatpush2.msra.mxu0 %v398
        %486 = vmatprep.subr.mxu0 0.0
        %487 = vmatpush2.msra.mxu0 %v397
        %488 = vmatprep.subr.mxu0 0.0
        %489 = vmatpush2.msra.mxu0 %v396
        %490 = vmatprep.subr.mxu0 0.0
        %491 = vmatpush2.msra.mxu0 %v395
        %492 = vmatprep.subr.mxu0 0.0
        %493 = vmatpush2.msra.mxu0 %v394
        %494 = vmatprep.subr.mxu0 0.0
        %495 = vmatpush2.msra.mxu0 %v393
        %496 = vmatprep.subr.mxu0 0.0
        %497 = vmatpush2.msra.mxu0 %v392
        %498 = vmatprep.subr.mxu0 0.0
        %499 = vmatpush2.msra.mxu0 %v391
        %500 = vmatprep.subr.mxu0 0.0
        %501 = vmatpush2.msra.mxu0 %v390
        %502 = vmatprep.subr.mxu0 0.0
        %503 = vmatpush2.msra.mxu0 %v389
        %504 = vmatprep.mubr.f32.mxu0 %v370
        %505 = vmatmul.mubr.f32.gmra.mxu0 %v369
        %v506 = vpop.f32.mrf.mxu0
        %v507 = vadd.f32 0.0, %v506
        %v508 = vpop.f32.mrf.mxu0
        %509 = vdwg.mxu0
        %510 = vmatprep.subr.mxu0 0.0
        %511 = vmatpush1.msra.mxu0 %v420
        %512 = vmatprep.subr.mxu0 0.0
        %513 = vmatpush1.msra.mxu0 %v419
        %514 = vmatprep.subr.mxu0 0.0
        %515 = vmatpush1.msra.mxu0 %v418
        %516 = vmatprep.subr.mxu0 0.0
        %517 = vmatpush1.msra.mxu0 %v417
        %518 = vmatprep.subr.mxu0 0.0
        %519 = vmatpush1.msra.mxu0 %v416
        %520 = vmatprep.subr.mxu0 0.0
        %521 = vmatpush1.msra.mxu0 %v415
        %522 = vmatprep.subr.mxu0 0.0
        %523 = vmatpush1.msra.mxu0 %v414
        %524 = vmatprep.subr.mxu0 0.0
        %525 = vmatpush1.msra.mxu0 %v413
        %526 = vmatprep.subr.mxu0 0.0
        %527 = vmatpush1.msra.mxu0 %v412
        %528 = vmatprep.subr.mxu0 0.0
        %529 = vmatpush1.msra.mxu0 %v411
        %530 = vmatprep.subr.mxu0 0.0
        %531 = vmatpush1.msra.mxu0 %v410
        %532 = vmatprep.subr.mxu0 0.0
        %533 = vmatpush1.msra.mxu0 %v409
        %534 = vmatprep.subr.mxu0 0.0
        %535 = vmatpush1.msra.mxu0 %v408
        %536 = vmatprep.subr.mxu0 0.0
        %537 = vmatpush1.msra.mxu0 %v407
        %538 = vmatprep.subr.mxu0 0.0
        %539 = vmatpush1.msra.mxu0 %v406
        %540 = vmatprep.subr.mxu0 0.0
        %541 = vmatpush1.msra.mxu0 %v405
        %542 = vmatprep.subr.mxu0 0.0
        %543 = vmatpush2.msra.mxu0 0.0
        %544 = vmatprep.subr.mxu0 0.0
        %545 = vmatpush2.msra.mxu0 %v435
        %546 = vmatprep.subr.mxu0 0.0
        %547 = vmatpush2.msra.mxu0 %v434
        %548 = vmatprep.subr.mxu0 0.0
        %549 = vmatpush2.msra.mxu0 %v433
        %550 = vmatprep.subr.mxu0 0.0
        %551 = vmatpush2.msra.mxu0 %v432
        %552 = vmatprep.subr.mxu0 0.0
        %553 = vmatpush2.msra.mxu0 %v431
        %554 = vmatprep.subr.mxu0 0.0
        %555 = vmatpush2.msra.mxu0 %v430
        %556 = vmatprep.subr.mxu0 0.0
        %557 = vmatpush2.msra.mxu0 %v429
        %558 = vmatprep.subr.mxu0 0.0
        %559 = vmatpush2.msra.mxu0 %v428
        %560 = vmatprep.subr.mxu0 0.0
        %561 = vmatpush2.msra.mxu0 %v427
        %562 = vmatprep.subr.mxu0 0.0
        %563 = vmatpush2.msra.mxu0 %v426
        %564 = vmatprep.subr.mxu0 0.0
        %565 = vmatpush2.msra.mxu0 %v425
        %566 = vmatprep.subr.mxu0 0.0
        %567 = vmatpush2.msra.mxu0 %v424
        %568 = vmatprep.subr.mxu0 0.0
        %569 = vmatpush2.msra.mxu0 %v423
        %570 = vmatprep.subr.mxu0 0.0
        %571 = vmatpush2.msra.mxu0 %v422
        %572 = vmatprep.subr.mxu0 0.0
        %573 = vmatpush2.msra.mxu0 %v421
        %574 = vmatprep.mubr.f32.mxu0 %v438
        %575 = vmatmul.mubr.f32.gmra.mxu0 %v371
        %v576 = vpop.f32.mrf.mxu0
        %v577 = vadd.f32 %v507, %v576
        %v578 = vpop.f32.mrf.mxu0
        %579 = vdwg.mxu0
        %vm580 = vcmask 97280
        %v582 = vsel %vm580, %v237, 0
        %vm584 = vcmask 1043456
        %v586 = vsel %vm584, %v239, 0
        %588 = vmatprep.subr.mxu0 0.0
        %589 = vmatpush1.msra.mxu0 0.0
        %590 = vmatprep.subr.mxu0 0.0
        %591 = vmatpush1.msra.mxu0 0.0
        %592 = vmatprep.subr.mxu0 0.0
        %593 = vmatpush1.msra.mxu0 0.0
        %594 = vmatprep.subr.mxu0 0.0
        %595 = vmatpush1.msra.mxu0 0.0
        %596 = vmatprep.subr.mxu0 0.0
        %597 = vmatpush1.msra.mxu0 0.0
        %598 = vmatprep.subr.mxu0 0.0
        %599 = vmatpush1.msra.mxu0 0.0
        %600 = vmatprep.subr.mxu0 0.0
        %601 = vmatpush1.msra.mxu0 0.0
        %602 = vmatprep.subr.mxu0 0.0
        %603 = vmatpush1.msra.mxu0 0.0
        %604 = vmatprep.subr.mxu0 0.0
        %605 = vmatpush1.msra.mxu0 0.0
        %606 = vmatprep.subr.mxu0 0.0
        %607 = vmatpush1.msra.mxu0 0.0
        %608 = vmatprep.subr.mxu0 0.0
        %609 = vmatpush1.msra.mxu0 0.0
        %610 = vmatprep.subr.mxu0 0.0
        %611 = vmatpush1.msra.mxu0 0.0
        %612 = vmatprep.subr.mxu0 0.0
        %613 = vmatpush1.msra.mxu0 0.0
        %614 = vmatprep.subr.mxu0 0.0
        %615 = vmatpush1.msra.mxu0 0.0
        %616 = vmatprep.subr.mxu0 0.0
        %617 = vmatpush1.msra.mxu0 %v586
        %618 = vmatprep.subr.mxu0 0.0
        %619 = vmatpush1.msra.mxu0 %v238
        %620 = vmatprep.subr.mxu0 0.0
        %621 = vmatpush2.msra.mxu0 0.0
        %622 = vmatprep.subr.mxu0 0.0
        %623 = vmatpush2.msra.mxu0 0.0
        %624 = vmatprep.subr.mxu0 0.0
        %625 = vmatpush2.msra.mxu0 0.0
        %626 = vmatprep.subr.mxu0 0.0
        %627 = vmatpush2.msra.mxu0 0.0
        %628 = vmatprep.subr.mxu0 0.0
        %629 = vmatpush2.msra.mxu0 0.0
        %630 = vmatprep.subr.mxu0 0.0
        %631 = vmatpush2.msra.mxu0 0.0
        %632 = vmatprep.subr.mxu0 0.0
        %633 = vmatpush2.msra.mxu0 0.0
        %634 = vmatprep.subr.mxu0 0.0
        %635 = vmatpush2.msra.mxu0 0.0
        %636 = vmatprep.subr.mxu0 0.0
        %637 = vmatpush2.msra.mxu0 0.0
        %638 = vmatprep.subr.mxu0 0.0
        %639 = vmatpush2.msra.mxu0 0.0
        %640 = vmatprep.subr.mxu0 0.0
        %641 = vmatpush2.msra.mxu0 0.0
        %642 = vmatprep.subr.mxu0 0.0
        %643 = vmatpush2.msra.mxu0 0.0
        %644 = vmatprep.subr.mxu0 0.0
        %645 = vmatpush2.msra.mxu0 0.0
        %646 = vmatprep.subr.mxu0 0.0
        %647 = vmatpush2.msra.mxu0 0.0
        %648 = vmatprep.subr.mxu0 0.0
        %649 = vmatpush2.msra.mxu0 0.0
        %650 = vmatprep.subr.mxu0 0.0
        %651 = vmatpush2.msra.mxu0 0.0
        %652 = vmatprep.mubr.f32.mxu0 0.0
        %653 = vmatmul.mubr.f32.gmra.mxu0 %v582
        %v654 = vpop.f32.mrf.mxu0
        %v655 = vadd.f32 %v352, %v654
        %v656 = vpop.f32.mrf.mxu0
        %657 = vdwg.mxu0
        %v658 = vadd.f32 %v655, %v577
        %vm659 = vcmask 261120
        %660 = vst.msk [vmem:[%s228] sm:$0xff] %vm659, %v658
        %s661 = sand.u32 %s142, 1
        %s662 = scalar_lea.sflag [#allocation3], %s661
        %s663 = sand.u32 %s142, 1
        %s664 = smul.addr %s663, 8
        %s665 = scalar_lea.vmem [#allocation2], %s664
        // Predicated region
        $region41: #{tpu_custom_call.1} parent=39 // pred_check
          %p666 = pneg %p152
        $region42: #{tpu_custom_call.1} parent=39 // pred_check_branch
          %668 = sbr.rel (%p666) target = $region44
        $region43: #{tpu_custom_call.1} parent=39 // pred_region
          %s670 = ssub.s32 128, 128
          %671 = vsyncadd %s662, %s670
          %s672 = smul.addr %s19, 128
          %s673 = scalar_lea.hbm %s5, %s672
          %s675 = sshll.u32 %s665, 4
          %s676 = int_to_ptr.vmem [resolvable:$true] %s675
          %678 = dma.vmem_to_hbm [thread:$0]  %s676, 128, %s673, %s662
        $region44: #{tpu_custom_call.1} parent=39 // pred_fallthru
          _
      $region40: #{tpu_custom_call.1} parent=5 // pred_fallthru
        _
      %p679 = scmp.le.s32.totalorder 2, %s14
      // Predicated region
      $region45: #{tpu_custom_call.1} parent=5 // pred_check
        %p680 = pneg %p679
      $region46: #{tpu_custom_call.1} parent=5 // pred_check_branch
        %682 = sbr.rel (%p680) target = $region48
      $region47: #{tpu_custom_call.1} parent=5 // pred_region
        %s683 = ssub.s32 %s14, 2
        // Predicated region
        $region49: #{tpu_custom_call.1} parent=47 // pred_check
          %p684 = pneg %p158
        $region50: #{tpu_custom_call.1} parent=47 // pred_check_branch
          %686 = sbr.rel (%p684) target = $region52
        $region51: #{tpu_custom_call.1} parent=47 // pred_region
          %s687 = sand.u32 %s143, 1
          %s688 = scalar_lea.sflag [#allocation3], %s687
          %s689 = sand.u32 %s143, 1
          %s690 = smul.addr %s689, 8
          %s691 = scalar_lea.vmem [#allocation2], %s690
          %692 = dma.done %s688, 128
        $region52: #{tpu_custom_call.1} parent=47 // pred_fallthru
          _
      $region48: #{tpu_custom_call.1} parent=5 // pred_fallthru
        _
    $region6: #{tpu_custom_call.1} parent=1 // loop_footer
      %s18 = sadd.s32 1, %s14
    $region7: #{tpu_custom_call.1} parent=1 // loop_footer_branch
      %13 = sbr.rel target = $region3
    $region8: #{tpu_custom_call.1} parent=1 // loop_exit
      _
    %693 = vsyncpa [#allocation3], 1
    %s694 = scalar_lea.sflag [#allocation3], 1
    %695 = vsyncpa %s694, 1

</llo_original>
